<compile_context>
chip_gen: v5e
topology: v5e:2x2
jax: 0.10.0
libtpu: 0.0.40
codegen_flags: <defaults>
</compile_context>

<pallas_src>
import functools
import math

import jax
import jax.numpy as jnp
from jax import lax
from jax.experimental import pallas as pl
from jax.experimental.pallas import tpu as pltpu


def _batch_tile(batch):
    """Pick a batch tile: >=2 blocks of multiple-of-8 rows when possible (v7x megacore),
    otherwise keep the whole batch resident in a single block."""
    for bt in (128, 64, 32, 16, 8):
        if batch % bt == 0 and batch // bt >= 2:
            return bt
    return batch


def fused_forward_kernel(*refs, hops, key_size, mem_size, num_rnk, n_eval, n_rnk_hidden):
    it = iter(refs)
    dlg_ref, crd_ref, u0_ref, A_ref = next(it), next(it), next(it), next(it)
    eval_wb = [(next(it), next(it)) for _ in range(n_eval)]
    rnk_wb = [(next(it), next(it)) for _ in range(n_rnk_hidden)]
    fw_ref, fb_ref = next(it), next(it)
    logits_ref, preds_ref = next(it), next(it)

    K, M, R = key_size, mem_size, num_rnk
    f32 = jnp.float32
    mm_dtype = A_ref.dtype                               # matmul operand dtype (bf16 by default)

    # ---------- RequirementNet: MemN2N with adjacent weight tying (C_h = A_{h+1}) ----------
    dlg2 = dlg_ref[...]                                  # (bt*M, E), flattened wrapper-side
    B = dlg2.shape[0] // M                               # per-block batch rows
    # ONE wide MXU projection feeds every hop: m_h = proj[..., h*K:(h+1)*K], c_h = next slice.
    proj = jnp.dot(dlg2, A_ref[...], preferred_element_type=f32)   # (bt*M, (hops+1)*K), f32 acc
    proj = proj.reshape(B, M, (hops + 1) * K)            # single relayout for the whole hop loop
    u = jnp.broadcast_to(u0_ref[...], (B, K))            # precomputed queries @ A_0 (no in-kernel push)
    for h in range(hops):                                # hops is small & static
        m = proj[:, :, h * K:(h + 1) * K]
        c = proj[:, :, (h + 1) * K:(h + 2) * K]
        s = jnp.sum(m * u[:, None, :], axis=2)           # (B, M) attention scores, f32
        s = s - jnp.max(s, axis=1, keepdims=True)
        p = jnp.exp(s)
        p = p * pl.reciprocal(jnp.sum(p, axis=1, keepdims=True), approx=True)   # EUP reciprocal
        u = u + jnp.sum(c * p[:, :, None], axis=1)       # (B, K)
    req = u                                              # (B, K) f32
    req_mm = req.astype(mm_dtype)

    # ---------- PolicyNet: evaluation MLP, all num_rnk candidates batched into ONE chain ----------
    crd = crd_ref[...]                                   # (bt*R, F) batch-major, flattened wrapper-side
    F = crd.shape[-1]
    w0_ref, b0_ref = eval_wb[0]
    # split first-layer weight so concat([crd_r, req]) @ W == crd_r @ W[:F] + req @ W[F:]
    req0 = jnp.dot(req_mm, w0_ref[F:, :], preferred_element_type=f32) + b0_ref[...]   # (B, H0)
    H0 = req0.shape[-1]
    req0_rep = jnp.broadcast_to(req0[:, None, :], (B, R, H0)).reshape(B * R, H0)
    x = jnp.maximum(jnp.dot(crd, w0_ref[:F, :], preferred_element_type=f32) + req0_rep, 0.0)
    for w_ref, b_ref in eval_wb[1:]:
        x = jnp.maximum(
            jnp.dot(x.astype(mm_dtype), w_ref[...], preferred_element_type=f32) + b_ref[...], 0.0)
    D = x.shape[-1]
    x3 = x.reshape(B, R, D)                              # per-candidate view, used only by the ranking sum

    # ---------- PolicyNet: ranking MLP on [evl_0 | ... | evl_{R-1} | req] ----------
    wr_ref, br_ref = rnk_wb[0] if n_rnk_hidden > 0 else (fw_ref, fb_ref)
    RD = R * D
    y = jnp.dot(req_mm, wr_ref[RD:, :], preferred_element_type=f32) + br_ref[...]
    for r in range(R):                                   # R tiny & static; static sublane weight slices
        y = y + jnp.dot(x3[:, r, :].astype(mm_dtype), wr_ref[r * D:(r + 1) * D, :],
                        preferred_element_type=f32)
    if n_rnk_hidden > 0:
        y = jnp.maximum(y, 0.0)
        for w_ref, b_ref in rnk_wb[1:]:
            y = jnp.maximum(
                jnp.dot(y.astype(mm_dtype), w_ref[...], preferred_element_type=f32) + b_ref[...], 0.0)
        y = jnp.dot(y.astype(mm_dtype), fw_ref[...], preferred_element_type=f32) + fb_ref[...]

    logits_ref[...] = y                                  # (bt, num_rnk!) f32
    # torch.argmax (first occurrence of max); final logits kept in f32 so ties are stable.
    # TODO(synk): logits/preds are narrow (<128 lanes) -> masked stores; lane-pad if batch is scaled up.
    n_cls = y.shape[1]
    col = lax.broadcasted_iota(jnp.int32, y.shape, 1)
    maxv = jnp.max(y, axis=1, keepdims=True)
    cand = jnp.where(y == maxv, col, n_cls)
    preds_ref[...] = jnp.min(cand, axis=1, keepdims=True)


# ---------------- Model (RequirementNet + PolicyNet) ----------------
class Model:
    def __init__(self, emb_size, key_size, mem_size, meta_size, hops, item_size,
                 coordi_size, eval_node, num_rnk, use_batch_norm, use_dropout,
                 zero_prob, use_multimodal, img_feat_size, seed=0,
                 matmul_dtype=jnp.bfloat16):
        del item_size, zero_prob  # not used in the forward pass
        self.hops = hops
        self.num_rnk = num_rnk
        self.key_size = key_size
        self.mem_size = mem_size
        self.matmul_dtype = matmul_dtype
        # TODO(synk): use_batch_norm requires trained running statistics (training-time op); not modeled.
        assert not use_batch_norm
        assert not use_dropout  # dropout is a no-op at inference anyway

        buf = eval_node[1:-1].split('][')
        num_hid_eval = list(map(int, buf[0].split(',')))
        num_hid_rnk = list(map(int, buf[1].split(',')))

        coordi_feat = emb_size * meta_size * coordi_size
        num_in_eval = coordi_feat + key_size
        if use_multimodal:
            num_in_eval += img_feat_size

        key = jax.random.PRNGKey(seed)
        ks = iter(jax.random.split(key, 64))

        # MemN2N parameters: queries ~ N(0, 0.01), A_0..A_hops ~ N(0, 0.01), adjacent tying C_h = A_{h+1}
        queries = 0.01 * jax.random.normal(next(ks), (1, emb_size), jnp.float32)
        A = 0.01 * jax.random.normal(next(ks), (hops + 1, emb_size, key_size), jnp.float32)
        # precompute the query projection (weights-only) -> removes a 1-row MXU push per call
        self.u0 = jnp.dot(queries, A[0])                                        # (1, K), f32
        # pre-fold the adjacent-tied hop stack into one wide matrix -> single wide MXU projection
        self.A_wide = jnp.transpose(A, (1, 0, 2)).reshape(
            emb_size, (hops + 1) * key_size).astype(matmul_dtype)

        def linear(kw, kb, fan_in, fan_out):
            bound = 1.0 / math.sqrt(fan_in)
            w = jax.random.uniform(kw, (fan_in, fan_out), jnp.float32, -bound, bound)
            b = jax.random.uniform(kb, (1, fan_out), jnp.float32, -bound, bound)
            return w.astype(matmul_dtype), b             # bf16 weights (MXU operands), f32 biases

        # evaluation MLP (per coordination candidate), ReLU after every layer
        self.eval_layers = []
        num_in = num_in_eval
        for num_out in num_hid_eval:
            self.eval_layers.append(linear(next(ks), next(ks), num_in, num_out))
            num_in = num_out
        eval_out_node = num_in

        # ranking MLP: hidden layers with ReLU, final layer -> num_rnk! logits
        self.rnk_hidden = []
        num_in = eval_out_node * num_rnk + key_size
        for num_out in num_hid_rnk:
            self.rnk_hidden.append(linear(next(ks), next(ks), num_in, num_out))
            num_in = num_out
        self.rnk_final = linear(next(ks), next(ks), num_in, math.factorial(num_rnk))

    def __call__(self, dlg, crd):
        B, M, E = dlg.shape
        R = self.num_rnk
        F = crd.shape[-1]
        n_cls = math.factorial(R)
        mm = self.matmul_dtype

        # wrapper-side flattens are free metadata changes (no transpose); batch-major crd keeps
        # each batch tile's rows contiguous so the batch grid can block both inputs.
        dlg_flat = dlg.reshape(B * M, E).astype(mm)
        crd_flat = crd.reshape(B * R, F).astype(mm)

        bt = _batch_tile(B)
        grid = (B // bt,)

        args = [dlg_flat, crd_flat, self.u0, self.A_wide]
        for w, b in self.eval_layers:
            args += [w, b]
        for w, b in self.rnk_hidden:
            args += [w, b]
        args += list(self.rnk_final)

        # weights / small constants: whole-array, VMEM-resident across all grid steps
        resident = pl.BlockSpec(memory_space=pltpu.MemorySpace.VMEM)
        in_specs = [pl.BlockSpec((bt * M, E), lambda i: (i, 0)),
                    pl.BlockSpec((bt * R, F), lambda i: (i, 0))]
        in_specs += [resident] * (len(args) - 2)
        out_specs = (pl.BlockSpec((bt, n_cls), lambda i: (i, 0)),
                     pl.BlockSpec((bt, 1), lambda i: (i, 0)))

        kernel = functools.partial(
            fused_forward_kernel, hops=self.hops, key_size=self.key_size,
            mem_size=M, num_rnk=R, n_eval=len(self.eval_layers),
            n_rnk_hidden=len(self.rnk_hidden))

        logits, preds = pl.pallas_call(
            kernel,
            grid=grid,
            out_shape=(jax.ShapeDtypeStruct((B, n_cls), jnp.float32),
                       jax.ShapeDtypeStruct((B, 1), jnp.int32)),
            in_specs=in_specs,
            out_specs=out_specs,
            compiler_params=pltpu.CompilerParams(
                dimension_semantics=("parallel",)),
        )(*args)
        return logits, preds.reshape(B)


if __name__ == "__main__":
    # small, forward-consistent shapes
    emb_size, key_size, mem_size, meta_size, hops = 16, 32, 8, 4, 2
    item_size, coordi_size, num_rnk = 16, 4, 3
    eval_node = '[32,16][8]'
    batch = 2

    model = Model(emb_size, key_size, mem_size, meta_size, hops, item_size,
                  coordi_size, eval_node, num_rnk,
                  use_batch_norm=False, use_dropout=False, zero_prob=0.0,
                  use_multimodal=False, img_feat_size=128, seed=0)

    key = jax.random.PRNGKey(0)
    k1, k2 = jax.random.split(key)
    dlg = jax.random.normal(k1, (batch, mem_size, emb_size), jnp.float32)
    coordi_feat = emb_size * meta_size * coordi_size
    crd = jax.random.normal(k2, (batch, num_rnk, coordi_feat), jnp.float32)

    logits, preds = model(dlg, crd)
    jax.block_until_ready((logits, preds))
    assert logits.shape == (batch, math.factorial(num_rnk))
    assert preds.shape == (batch,)
    print("KERNEL_OK")
</pallas_src>

<mosaic_0001>
module attributes {stable_mosaic.version = 11 : i64} {
  func.func @fused_forward_kernel(%arg0: i32, %arg1: memref<16x16xbf16, #tpu.memory_space<vmem>>, %arg2: memref<6x256xbf16, #tpu.memory_space<vmem>>, %arg3: memref<1x32xf32, #tpu.memory_space<vmem>>, %arg4: memref<16x96xbf16, #tpu.memory_space<vmem>>, %arg5: memref<288x32xbf16, #tpu.memory_space<vmem>>, %arg6: memref<1x32xf32, #tpu.memory_space<vmem>>, %arg7: memref<32x16xbf16, #tpu.memory_space<vmem>>, %arg8: memref<1x16xf32, #tpu.memory_space<vmem>>, %arg9: memref<80x8xbf16, #tpu.memory_space<vmem>>, %arg10: memref<1x8xf32, #tpu.memory_space<vmem>>, %arg11: memref<8x6xbf16, #tpu.memory_space<vmem>>, %arg12: memref<1x6xf32, #tpu.memory_space<vmem>>, %arg13: memref<2x6xf32, #tpu.memory_space<vmem>>, %arg14: memref<2x1xi32, #tpu.memory_space<vmem>>) attributes {dimension_semantics = [#tpu.dimension_semantics<parallel>], iteration_bounds = array<i64: 1>, scalar_prefetch = 0 : i64, scratch_operands = 0 : i64, tpu.core_type = #tpu.core_type<tc>, window_params = [{transform_indices = @transform_0, window_bounds = array<i64: 16, 16>}, {transform_indices = @transform_1, window_bounds = array<i64: 6, 256>}, {pipeline_mode = #tpu.pipeline_mode<synchronous>, transform_indices = @transform_2, window_bounds = array<i64: 1, 32>}, {pipeline_mode = #tpu.pipeline_mode<synchronous>, transform_indices = @transform_3, window_bounds = array<i64: 16, 96>}, {pipeline_mode = #tpu.pipeline_mode<synchronous>, transform_indices = @transform_4, window_bounds = array<i64: 288, 32>}, {pipeline_mode = #tpu.pipeline_mode<synchronous>, transform_indices = @transform_5, window_bounds = array<i64: 1, 32>}, {pipeline_mode = #tpu.pipeline_mode<synchronous>, transform_indices = @transform_6, window_bounds = array<i64: 32, 16>}, {pipeline_mode = #tpu.pipeline_mode<synchronous>, transform_indices = @transform_7, window_bounds = array<i64: 1, 16>}, {pipeline_mode = #tpu.pipeline_mode<synchronous>, transform_indices = @transform_8, window_bounds = array<i64: 80, 8>}, {pipeline_mode = #tpu.pipeline_mode<synchronous>, transform_indices = @transform_9, window_bounds = array<i64: 1, 8>}, {pipeline_mode = #tpu.pipeline_mode<synchronous>, transform_indices = @transform_10, window_bounds = array<i64: 8, 6>}, {pipeline_mode = #tpu.pipeline_mode<synchronous>, transform_indices = @transform_11, window_bounds = array<i64: 1, 6>}, {transform_indices = @transform_12, window_bounds = array<i64: 2, 6>}, {transform_indices = @transform_13, window_bounds = array<i64: 2, 1>}]} {
    %c0 = arith.constant 0 : index
    %c0_0 = arith.constant 0 : index
    %0 = vector.load %arg1[%c0, %c0_0] : memref<16x16xbf16, #tpu.memory_space<vmem>>, vector<16x16xbf16>
    %c0_1 = arith.constant 0 : index
    %c0_2 = arith.constant 0 : index
    %1 = vector.load %arg4[%c0_1, %c0_2] : memref<16x96xbf16, #tpu.memory_space<vmem>>, vector<16x96xbf16>
    %cst = arith.constant dense<0.000000e+00> : vector<16x96xf32>
    %2 = tpu.matmul %0, %1, %cst {dimension_numbers = #tpu.dot_dimension_numbers<[1], [0], [0], [1], [0, 0, 1, 1], [], []>} : vector<16x16xbf16>, vector<16x96xbf16>, vector<16x96xf32> -> vector<16x96xf32>
    %3 = vector.shape_cast %2 : vector<16x96xf32> to vector<2x8x96xf32>
    %c0_3 = arith.constant 0 : index
    %c0_4 = arith.constant 0 : index
    %4 = vector.load %arg3[%c0_3, %c0_4] : memref<1x32xf32, #tpu.memory_space<vmem>>, vector<1x32xf32>
    %5 = vector.shape_cast %4 : vector<1x32xf32> to vector<1x32xf32>
    %6 = vector.broadcast %5 : vector<1x32xf32> to vector<2x32xf32>
    %7 = vector.extract_strided_slice %3 {offsets = [0, 0, 0], sizes = [2, 8, 32], strides = [1, 1, 1]} : vector<2x8x96xf32> to vector<2x8x32xf32>
    %8 = vector.extract_strided_slice %3 {offsets = [0, 0, 32], sizes = [2, 8, 32], strides = [1, 1, 1]} : vector<2x8x96xf32> to vector<2x8x32xf32>
    %9 = vector.shape_cast %6 : vector<2x32xf32> to vector<2x1x32xf32>
    %10 = vector.broadcast %9 : vector<2x1x32xf32> to vector<2x8x32xf32>
    %11 = arith.mulf %7, %10 : vector<2x8x32xf32>
    %cst_5 = arith.constant dense<0.000000e+00> : vector<2x8xf32>
    %12 = vector.multi_reduction <add>, %11, %cst_5 [2] : vector<2x8x32xf32> to vector<2x8xf32>
    %cst_6 = arith.constant dense<0xFF800000> : vector<2xf32>
    %13 = vector.multi_reduction <maximumf>, %12, %cst_6 [1] : vector<2x8xf32> to vector<2xf32>
    %14 = vector.shape_cast %13 : vector<2xf32> to vector<2x1xf32>
    %15 = vector.broadcast %14 : vector<2x1xf32> to vector<2x8xf32>
    %16 = arith.subf %12, %15 : vector<2x8xf32>
    %17 = math.exp %16 : vector<2x8xf32>
    %cst_7 = arith.constant dense<0.000000e+00> : vector<2xf32>
    %18 = vector.multi_reduction <add>, %17, %cst_7 [1] : vector<2x8xf32> to vector<2xf32>
    %19 = vector.shape_cast %18 : vector<2xf32> to vector<2x1xf32>
    %20 = tpu.reciprocal %19 {approx = true} : vector<2x1xf32> -> vector<2x1xf32>
    %21 = vector.broadcast %20 : vector<2x1xf32> to vector<2x8xf32>
    %22 = arith.mulf %17, %21 : vector<2x8xf32>
    %23 = vector.shape_cast %22 : vector<2x8xf32> to vector<2x8x1xf32>
    %24 = vector.broadcast %23 : vector<2x8x1xf32> to vector<2x8x32xf32>
    %25 = arith.mulf %8, %24 : vector<2x8x32xf32>
    %cst_8 = arith.constant dense<0.000000e+00> : vector<2x32xf32>
    %26 = vector.multi_reduction <add>, %25, %cst_8 [1] : vector<2x8x32xf32> to vector<2x32xf32>
    %27 = arith.addf %6, %26 : vector<2x32xf32>
    %28 = vector.extract_strided_slice %3 {offsets = [0, 0, 32], sizes = [2, 8, 32], strides = [1, 1, 1]} : vector<2x8x96xf32> to vector<2x8x32xf32>
    %29 = vector.extract_strided_slice %3 {offsets = [0, 0, 64], sizes = [2, 8, 32], strides = [1, 1, 1]} : vector<2x8x96xf32> to vector<2x8x32xf32>
    %30 = vector.shape_cast %27 : vector<2x32xf32> to vector<2x1x32xf32>
    %31 = vector.broadcast %30 : vector<2x1x32xf32> to vector<2x8x32xf32>
    %32 = arith.mulf %28, %31 : vector<2x8x32xf32>
    %cst_9 = arith.constant dense<0.000000e+00> : vector<2x8xf32>
    %33 = vector.multi_reduction <add>, %32, %cst_9 [2] : vector<2x8x32xf32> to vector<2x8xf32>
    %cst_10 = arith.constant dense<0xFF800000> : vector<2xf32>
    %34 = vector.multi_reduction <maximumf>, %33, %cst_10 [1] : vector<2x8xf32> to vector<2xf32>
    %35 = vector.shape_cast %34 : vector<2xf32> to vector<2x1xf32>
    %36 = vector.broadcast %35 : vector<2x1xf32> to vector<2x8xf32>
    %37 = arith.subf %33, %36 : vector<2x8xf32>
    %38 = math.exp %37 : vector<2x8xf32>
    %cst_11 = arith.constant dense<0.000000e+00> : vector<2xf32>
    %39 = vector.multi_reduction <add>, %38, %cst_11 [1] : vector<2x8xf32> to vector<2xf32>
    %40 = vector.shape_cast %39 : vector<2xf32> to vector<2x1xf32>
    %41 = tpu.reciprocal %40 {approx = true} : vector<2x1xf32> -> vector<2x1xf32>
    %42 = vector.broadcast %41 : vector<2x1xf32> to vector<2x8xf32>
    %43 = arith.mulf %38, %42 : vector<2x8xf32>
    %44 = vector.shape_cast %43 : vector<2x8xf32> to vector<2x8x1xf32>
    %45 = vector.broadcast %44 : vector<2x8x1xf32> to vector<2x8x32xf32>
    %46 = arith.mulf %29, %45 : vector<2x8x32xf32>
    %cst_12 = arith.constant dense<0.000000e+00> : vector<2x32xf32>
    %47 = vector.multi_reduction <add>, %46, %cst_12 [1] : vector<2x8x32xf32> to vector<2x32xf32>
    %48 = arith.addf %27, %47 : vector<2x32xf32>
    %49 = arith.truncf %48 : vector<2x32xf32> to vector<2x32xbf16>
    %c0_13 = arith.constant 0 : index
    %c0_14 = arith.constant 0 : index
    %50 = vector.load %arg2[%c0_13, %c0_14] : memref<6x256xbf16, #tpu.memory_space<vmem>>, vector<6x256xbf16>
    %c256 = arith.constant 256 : index
    %c0_15 = arith.constant 0 : index
    %51 = vector.load %arg5[%c256, %c0_15] : memref<288x32xbf16, #tpu.memory_space<vmem>>, vector<32x32xbf16>
    %cst_16 = arith.constant dense<0.000000e+00> : vector<2x32xf32>
    %52 = tpu.matmul %49, %51, %cst_16 {dimension_numbers = #tpu.dot_dimension_numbers<[1], [0], [0], [1], [0, 0, 1, 1], [], []>} : vector<2x32xbf16>, vector<32x32xbf16>, vector<2x32xf32> -> vector<2x32xf32>
    %c0_17 = arith.constant 0 : index
    %c0_18 = arith.constant 0 : index
    %53 = vector.load %arg6[%c0_17, %c0_18] : memref<1x32xf32, #tpu.memory_space<vmem>>, vector<1x32xf32>
    %54 = vector.broadcast %53 : vector<1x32xf32> to vector<2x32xf32>
    %55 = arith.addf %52, %54 : vector<2x32xf32>
    %56 = vector.shape_cast %55 : vector<2x32xf32> to vector<2x1x32xf32>
    %57 = vector.shape_cast %56 : vector<2x1x32xf32> to vector<2x1x32xf32>
    %58 = vector.broadcast %57 : vector<2x1x32xf32> to vector<2x3x32xf32>
    %59 = vector.shape_cast %58 : vector<2x3x32xf32> to vector<6x32xf32>
    %c0_19 = arith.constant 0 : index
    %c0_20 = arith.constant 0 : index
    %60 = vector.load %arg5[%c0_19, %c0_20] : memref<288x32xbf16, #tpu.memory_space<vmem>>, vector<256x32xbf16>
    %cst_21 = arith.constant dense<0.000000e+00> : vector<6x32xf32>
    %61 = tpu.matmul %50, %60, %cst_21 {dimension_numbers = #tpu.dot_dimension_numbers<[1], [0], [0], [1], [0, 0, 1, 1], [], []>} : vector<6x256xbf16>, vector<256x32xbf16>, vector<6x32xf32> -> vector<6x32xf32>
    %62 = arith.addf %61, %59 : vector<6x32xf32>
    %cst_22 = arith.constant 0.000000e+00 : f32
    %63 = vector.broadcast %cst_22 : f32 to vector<6x32xf32>
    %64 = arith.maximumf %62, %63 : vector<6x32xf32>
    %65 = arith.truncf %64 : vector<6x32xf32> to vector<6x32xbf16>
    %c0_23 = arith.constant 0 : index
    %c0_24 = arith.constant 0 : index
    %66 = vector.load %arg7[%c0_23, %c0_24] : memref<32x16xbf16, #tpu.memory_space<vmem>>, vector<32x16xbf16>
    %cst_25 = arith.constant dense<0.000000e+00> : vector<6x16xf32>
    %67 = tpu.matmul %65, %66, %cst_25 {dimension_numbers = #tpu.dot_dimension_numbers<[1], [0], [0], [1], [0, 0, 1, 1], [], []>} : vector<6x32xbf16>, vector<32x16xbf16>, vector<6x16xf32> -> vector<6x16xf32>
    %c0_26 = arith.constant 0 : index
    %c0_27 = arith.constant 0 : index
    %68 = vector.load %arg8[%c0_26, %c0_27] : memref<1x16xf32, #tpu.memory_space<vmem>>, vector<1x16xf32>
    %69 = vector.broadcast %68 : vector<1x16xf32> to vector<6x16xf32>
    %70 = arith.addf %67, %69 : vector<6x16xf32>
    %cst_28 = arith.constant 0.000000e+00 : f32
    %71 = vector.broadcast %cst_28 : f32 to vector<6x16xf32>
    %72 = arith.maximumf %70, %71 : vector<6x16xf32>
    %73 = vector.shape_cast %72 : vector<6x16xf32> to vector<2x3x16xf32>
    %c48 = arith.constant 48 : index
    %c0_29 = arith.constant 0 : index
    %74 = vector.load %arg9[%c48, %c0_29] : memref<80x8xbf16, #tpu.memory_space<vmem>>, vector<32x8xbf16>
    %cst_30 = arith.constant dense<0.000000e+00> : vector<2x8xf32>
    %75 = tpu.matmul %49, %74, %cst_30 {dimension_numbers = #tpu.dot_dimension_numbers<[1], [0], [0], [1], [0, 0, 1, 1], [], []>} : vector<2x32xbf16>, vector<32x8xbf16>, vector<2x8xf32> -> vector<2x8xf32>
    %c0_31 = arith.constant 0 : index
    %c0_32 = arith.constant 0 : index
    %76 = vector.load %arg10[%c0_31, %c0_32] : memref<1x8xf32, #tpu.memory_space<vmem>>, vector<1x8xf32>
    %77 = vector.broadcast %76 : vector<1x8xf32> to vector<2x8xf32>
    %78 = arith.addf %75, %77 : vector<2x8xf32>
    %79 = vector.extract_strided_slice %73 {offsets = [0, 0, 0], sizes = [2, 1, 16], strides = [1, 1, 1]} : vector<2x3x16xf32> to vector<2x1x16xf32>
    %80 = vector.shape_cast %79 : vector<2x1x16xf32> to vector<2x16xf32>
    %81 = arith.truncf %80 : vector<2x16xf32> to vector<2x16xbf16>
    %c0_33 = arith.constant 0 : index
    %c0_34 = arith.constant 0 : index
    %82 = vector.load %arg9[%c0_33, %c0_34] : memref<80x8xbf16, #tpu.memory_space<vmem>>, vector<16x8xbf16>
    %cst_35 = arith.constant dense<0.000000e+00> : vector<2x8xf32>
    %83 = tpu.matmul %81, %82, %cst_35 {dimension_numbers = #tpu.dot_dimension_numbers<[1], [0], [0], [1], [0, 0, 1, 1], [], []>} : vector<2x16xbf16>, vector<16x8xbf16>, vector<2x8xf32> -> vector<2x8xf32>
    %84 = arith.addf %78, %83 : vector<2x8xf32>
    %85 = vector.extract_strided_slice %73 {offsets = [0, 1, 0], sizes = [2, 1, 16], strides = [1, 1, 1]} : vector<2x3x16xf32> to vector<2x1x16xf32>
    %86 = vector.shape_cast %85 : vector<2x1x16xf32> to vector<2x16xf32>
    %87 = arith.truncf %86 : vector<2x16xf32> to vector<2x16xbf16>
    %c16 = arith.constant 16 : index
    %c0_36 = arith.constant 0 : index
    %88 = vector.load %arg9[%c16, %c0_36] : memref<80x8xbf16, #tpu.memory_space<vmem>>, vector<16x8xbf16>
    %cst_37 = arith.constant dense<0.000000e+00> : vector<2x8xf32>
    %89 = tpu.matmul %87, %88, %cst_37 {dimension_numbers = #tpu.dot_dimension_numbers<[1], [0], [0], [1], [0, 0, 1, 1], [], []>} : vector<2x16xbf16>, vector<16x8xbf16>, vector<2x8xf32> -> vector<2x8xf32>
    %90 = arith.addf %84, %89 : vector<2x8xf32>
    %91 = vector.extract_strided_slice %73 {offsets = [0, 2, 0], sizes = [2, 1, 16], strides = [1, 1, 1]} : vector<2x3x16xf32> to vector<2x1x16xf32>
    %92 = vector.shape_cast %91 : vector<2x1x16xf32> to vector<2x16xf32>
    %93 = arith.truncf %92 : vector<2x16xf32> to vector<2x16xbf16>
    %c32 = arith.constant 32 : index
    %c0_38 = arith.constant 0 : index
    %94 = vector.load %arg9[%c32, %c0_38] : memref<80x8xbf16, #tpu.memory_space<vmem>>, vector<16x8xbf16>
    %cst_39 = arith.constant dense<0.000000e+00> : vector<2x8xf32>
    %95 = tpu.matmul %93, %94, %cst_39 {dimension_numbers = #tpu.dot_dimension_numbers<[1], [0], [0], [1], [0, 0, 1, 1], [], []>} : vector<2x16xbf16>, vector<16x8xbf16>, vector<2x8xf32> -> vector<2x8xf32>
    %96 = arith.addf %90, %95 : vector<2x8xf32>
    %cst_40 = arith.constant 0.000000e+00 : f32
    %97 = vector.broadcast %cst_40 : f32 to vector<2x8xf32>
    %98 = arith.maximumf %96, %97 : vector<2x8xf32>
    %99 = arith.truncf %98 : vector<2x8xf32> to vector<2x8xbf16>
    %c0_41 = arith.constant 0 : index
    %c0_42 = arith.constant 0 : index
    %100 = vector.load %arg11[%c0_41, %c0_42] : memref<8x6xbf16, #tpu.memory_space<vmem>>, vector<8x6xbf16>
    %cst_43 = arith.constant dense<0.000000e+00> : vector<2x6xf32>
    %101 = tpu.matmul %99, %100, %cst_43 {dimension_numbers = #tpu.dot_dimension_numbers<[1], [0], [0], [1], [0, 0, 1, 1], [], []>} : vector<2x8xbf16>, vector<8x6xbf16>, vector<2x6xf32> -> vector<2x6xf32>
    %c0_44 = arith.constant 0 : index
    %c0_45 = arith.constant 0 : index
    %102 = vector.load %arg12[%c0_44, %c0_45] : memref<1x6xf32, #tpu.memory_space<vmem>>, vector<1x6xf32>
    %103 = vector.broadcast %102 : vector<1x6xf32> to vector<2x6xf32>
    %104 = arith.addf %101, %103 : vector<2x6xf32>
    %c0_46 = arith.constant 0 : index
    %c0_47 = arith.constant 0 : index
    %105 = vector.load %arg13[%c0_46, %c0_47] : memref<2x6xf32, #tpu.memory_space<vmem>>, vector<2x6xf32>
    tpu.vector_store %arg13[%c0_46, %c0_47], %104 {strides = array<i32>} : memref<2x6xf32, #tpu.memory_space<vmem>>, vector<2x6xf32>,
    %106 = tpu.iota {dimensions = array<i32: 1>} : vector<2x6xi32>
    %cst_48 = arith.constant dense<0xFF800000> : vector<2xf32>
    %107 = vector.multi_reduction <maximumf>, %104, %cst_48 [1] : vector<2x6xf32> to vector<2xf32>
    %108 = vector.shape_cast %107 : vector<2xf32> to vector<2x1xf32>
    %109 = vector.broadcast %108 : vector<2x1xf32> to vector<2x6xf32>
    %110 = arith.cmpf oeq, %104, %109 : vector<2x6xf32>
    %c6_i32 = arith.constant 6 : i32
    %111 = vector.broadcast %c6_i32 : i32 to vector<2x6xi32>
    %112 = arith.select %110, %106, %111 : vector<2x6xi1>, vector<2x6xi32>
    %cst_49 = arith.constant dense<2147483647> : vector<2xi32>
    %113 = vector.multi_reduction <minsi>, %112, %cst_49 [1] : vector<2x6xi32> to vector<2xi32>
    %114 = vector.shape_cast %113 : vector<2xi32> to vector<2x1xi32>
    %c0_50 = arith.constant 0 : index
    %c0_51 = arith.constant 0 : index
    %115 = vector.load %arg14[%c0_50, %c0_51] : memref<2x1xi32, #tpu.memory_space<vmem>>, vector<2x1xi32>
    tpu.vector_store %arg14[%c0_50, %c0_51], %114 {strides = array<i32>} : memref<2x1xi32, #tpu.memory_space<vmem>>, vector<2x1xi32>,
    return
  }
  func.func @transform_0(%arg0: i32) -> (i32, i32) {
    %c0_i32 = arith.constant 0 : i32
    %c0_i32_0 = arith.constant 0 : i32
    return %arg0, %c0_i32 : i32, i32
  }
  func.func @transform_1(%arg0: i32) -> (i32, i32) {
    %c0_i32 = arith.constant 0 : i32
    %c0_i32_0 = arith.constant 0 : i32
    return %arg0, %c0_i32 : i32, i32
  }
  func.func @transform_2(%arg0: i32) -> (i32, i32) {
    %c0_i32 = arith.constant 0 : i32
    %c0_i32_0 = arith.constant 0 : i32
    %c0_i32_1 = arith.constant 0 : i32
    return %c0_i32, %c0_i32_0 : i32, i32
  }
  func.func @transform_3(%arg0: i32) -> (i32, i32) {
    %c0_i32 = arith.constant 0 : i32
    %c0_i32_0 = arith.constant 0 : i32
    %c0_i32_1 = arith.constant 0 : i32
    return %c0_i32, %c0_i32_0 : i32, i32
  }
  func.func @transform_4(%arg0: i32) -> (i32, i32) {
    %c0_i32 = arith.constant 0 : i32
    %c0_i32_0 = arith.constant 0 : i32
    %c0_i32_1 = arith.constant 0 : i32
    return %c0_i32, %c0_i32_0 : i32, i32
  }
  func.func @transform_5(%arg0: i32) -> (i32, i32) {
    %c0_i32 = arith.constant 0 : i32
    %c0_i32_0 = arith.constant 0 : i32
    %c0_i32_1 = arith.constant 0 : i32
    return %c0_i32, %c0_i32_0 : i32, i32
  }
  func.func @transform_6(%arg0: i32) -> (i32, i32) {
    %c0_i32 = arith.constant 0 : i32
    %c0_i32_0 = arith.constant 0 : i32
    %c0_i32_1 = arith.constant 0 : i32
    return %c0_i32, %c0_i32_0 : i32, i32
  }
  func.func @transform_7(%arg0: i32) -> (i32, i32) {
    %c0_i32 = arith.constant 0 : i32
    %c0_i32_0 = arith.constant 0 : i32
    %c0_i32_1 = arith.constant 0 : i32
    return %c0_i32, %c0_i32_0 : i32, i32
  }
  func.func @transform_8(%arg0: i32) -> (i32, i32) {
    %c0_i32 = arith.constant 0 : i32
    %c0_i32_0 = arith.constant 0 : i32
    %c0_i32_1 = arith.constant 0 : i32
    return %c0_i32, %c0_i32_0 : i32, i32
  }
  func.func @transform_9(%arg0: i32) -> (i32, i32) {
    %c0_i32 = arith.constant 0 : i32
    %c0_i32_0 = arith.constant 0 : i32
    %c0_i32_1 = arith.constant 0 : i32
    return %c0_i32, %c0_i32_0 : i32, i32
  }
  func.func @transform_10(%arg0: i32) -> (i32, i32) {
    %c0_i32 = arith.constant 0 : i32
    %c0_i32_0 = arith.constant 0 : i32
    %c0_i32_1 = arith.constant 0 : i32
    return %c0_i32, %c0_i32_0 : i32, i32
  }
  func.func @transform_11(%arg0: i32) -> (i32, i32) {
    %c0_i32 = arith.constant 0 : i32
    %c0_i32_0 = arith.constant 0 : i32
    %c0_i32_1 = arith.constant 0 : i32
    return %c0_i32, %c0_i32_0 : i32, i32
  }
  func.func @transform_12(%arg0: i32) -> (i32, i32) {
    %c0_i32 = arith.constant 0 : i32
    %c0_i32_0 = arith.constant 0 : i32
    return %arg0, %c0_i32 : i32, i32
  }
  func.func @transform_13(%arg0: i32) -> (i32, i32) {
    %c0_i32 = arith.constant 0 : i32
    %c0_i32_0 = arith.constant 0 : i32
    return %arg0, %c0_i32 : i32, i32
  }
}

</mosaic_0001>

<llo_original>
// kernel: tpu_custom_call.1
$region0: #{tpu_custom_call.1}
  #allocation0 [shape = 'u32[]', space=smem, size = 0x4, offset = 0x4, fixed_abs, tag = 'smem constant byte address 0x4 - core index']
  #allocation1 [shape = 'u32[72,128]{1,0:T(1,128)}', space=vmem, size = 0x9000, scoped, tag = 'internal scratch']
  %s0 = inlined_call_operand.vmem [shape: bf16[16,16], index: 0, kind: input, shape index: {}]
  %s1 = inlined_call_operand.vmem [shape: bf16[6,256], index: 1, kind: input, shape index: {}]
  %s2 = inlined_call_operand.vmem [shape: f32[1,32], index: 2, kind: input, shape index: {}]
  %s3 = inlined_call_operand.vmem [shape: bf16[16,96], index: 3, kind: input, shape index: {}]
  %s4 = inlined_call_operand.vmem [shape: bf16[288,32], index: 4, kind: input, shape index: {}]
  %s5 = inlined_call_operand.vmem [shape: f32[1,32], index: 5, kind: input, shape index: {}]
  %s6 = inlined_call_operand.vmem [shape: bf16[32,16], index: 6, kind: input, shape index: {}]
  %s7 = inlined_call_operand.vmem [shape: f32[1,16], index: 7, kind: input, shape index: {}]
  %s8 = inlined_call_operand.vmem [shape: bf16[80,8], index: 8, kind: input, shape index: {}]
  %s9 = inlined_call_operand.vmem [shape: f32[1,8], index: 9, kind: input, shape index: {}]
  %s10 = inlined_call_operand.vmem [shape: bf16[8,6], index: 10, kind: input, shape index: {}]
  %s11 = inlined_call_operand.vmem [shape: f32[1,6], index: 11, kind: input, shape index: {}]
  %s12 = inlined_call_operand.hbm [shape: f32[2,6], index: 12, kind: output, shape index: {0}]
  %s13 = inlined_call_operand.vmem [shape: s32[2,1], index: 13, kind: output, shape index: {1}]
  %14 = xla_tuple %s12, %s13
  %s15 = sld [smem:[#allocation0]]
  $region66: #{tpu_custom_call.1} parent=0
    _
  %s17 = ssub.s32 1, %s15
  %s18 = scalar_select 0, %s17, %s15
  $region1: #{tpu_custom_call.1} parent=0
    #allocation2 [shape = 'u8[1024]{0}', space=vmem, size = 0x400, scoped, tag = 'output window, operand 0, single buffered']
    #allocation3 [shape = 's32[1]{0}', space=sflag, size = 0x4, scoped, tag = 'scoped memory for tpu_custom_call.1']
    %19 = vsyncpa [#allocation3], 0
    // Predicated region
    $region2: #{tpu_custom_call.1} parent=1 // pred_check
      _
    $region3: #{tpu_custom_call.1} parent=1 // pred_check_branch
      %21 = sbr.rel (0) target = $region5
    $region4: #{tpu_custom_call.1} parent=1 // pred_region
      _
    $region5: #{tpu_custom_call.1} parent=1 // pred_fallthru
      _
    // Predicated region
    $region6: #{tpu_custom_call.1} parent=1 // pred_check
      _
    $region7: #{tpu_custom_call.1} parent=1 // pred_check_branch
      %23 = sbr.rel (0) target = $region9
    $region8: #{tpu_custom_call.1} parent=1 // pred_region
      _
    $region9: #{tpu_custom_call.1} parent=1 // pred_fallthru
      _
    // Predicated region
    $region10: #{tpu_custom_call.1} parent=1 // pred_check
      _
    $region11: #{tpu_custom_call.1} parent=1 // pred_check_branch
      %25 = sbr.rel (0) target = $region13
    $region12: #{tpu_custom_call.1} parent=1 // pred_region
      _
    $region13: #{tpu_custom_call.1} parent=1 // pred_fallthru
      _
    // Predicated region
    $region14: #{tpu_custom_call.1} parent=1 // pred_check
      _
    $region15: #{tpu_custom_call.1} parent=1 // pred_check_branch
      %27 = sbr.rel (0) target = $region17
    $region16: #{tpu_custom_call.1} parent=1 // pred_region
      _
    $region17: #{tpu_custom_call.1} parent=1 // pred_fallthru
      _
    // Predicated region
    $region18: #{tpu_custom_call.1} parent=1 // pred_check
      _
    $region19: #{tpu_custom_call.1} parent=1 // pred_check_branch
      %29 = sbr.rel (0) target = $region21
    $region20: #{tpu_custom_call.1} parent=1 // pred_region
      _
    $region21: #{tpu_custom_call.1} parent=1 // pred_fallthru
      _
    // Predicated region
    $region22: #{tpu_custom_call.1} parent=1 // pred_check
      _
    $region23: #{tpu_custom_call.1} parent=1 // pred_check_branch
      %31 = sbr.rel (0) target = $region25
    $region24: #{tpu_custom_call.1} parent=1 // pred_region
      _
    $region25: #{tpu_custom_call.1} parent=1 // pred_fallthru
      _
    // Predicated region
    $region26: #{tpu_custom_call.1} parent=1 // pred_check
      _
    $region27: #{tpu_custom_call.1} parent=1 // pred_check_branch
      %33 = sbr.rel (0) target = $region29
    $region28: #{tpu_custom_call.1} parent=1 // pred_region
      _
    $region29: #{tpu_custom_call.1} parent=1 // pred_fallthru
      _
    // Predicated region
    $region30: #{tpu_custom_call.1} parent=1 // pred_check
      _
    $region31: #{tpu_custom_call.1} parent=1 // pred_check_branch
      %35 = sbr.rel (0) target = $region33
    $region32: #{tpu_custom_call.1} parent=1 // pred_region
      _
    $region33: #{tpu_custom_call.1} parent=1 // pred_fallthru
      _
    // Predicated region
    $region34: #{tpu_custom_call.1} parent=1 // pred_check
      _
    $region35: #{tpu_custom_call.1} parent=1 // pred_check_branch
      %37 = sbr.rel (0) target = $region37
    $region36: #{tpu_custom_call.1} parent=1 // pred_region
      _
    $region37: #{tpu_custom_call.1} parent=1 // pred_fallthru
      _
    // Predicated region
    $region38: #{tpu_custom_call.1} parent=1 // pred_check
      _
    $region39: #{tpu_custom_call.1} parent=1 // pred_check_branch
      %39 = sbr.rel (0) target = $region41
    $region40: #{tpu_custom_call.1} parent=1 // pred_region
      _
    $region41: #{tpu_custom_call.1} parent=1 // pred_fallthru
      _
    // Predicated region
    $region42: #{tpu_custom_call.1} parent=1 // pred_check
      _
    $region43: #{tpu_custom_call.1} parent=1 // pred_check_branch
      %41 = sbr.rel (0) target = $region45
    $region44: #{tpu_custom_call.1} parent=1 // pred_region
      _
    $region45: #{tpu_custom_call.1} parent=1 // pred_fallthru
      _
    // Predicated region
    $region46: #{tpu_custom_call.1} parent=1 // pred_check
      _
    $region47: #{tpu_custom_call.1} parent=1 // pred_check_branch
      %43 = sbr.rel (0) target = $region49
    $region48: #{tpu_custom_call.1} parent=1 // pred_region
      _
    $region49: #{tpu_custom_call.1} parent=1 // pred_fallthru
      _
    %v45 = vld [vmem:[%s0] sm:$0xf]
    %v46 = vld [vmem:[%s0 + $0x4] sm:$0xf]
    %v47 = vld [vmem:[%s3] sm:$0xf]
    %v48 = vld [vmem:[%s3 + $0x4] sm:$0xf]
    %v51 = vunpack.c.l.b16 %v45
    %v52 = vunpack.c.l.b16 %v46
    %v53 = vpack.c.b16 %v52, %v51
    %v56 = vunpack.c.l.b16 %v47
    %v57 = vunpack.c.l.b16 %v48
    %v58 = vpack.c.b16 %v57, %v56
    %vm60 = vcmask 130048
    %v62 = vsel %vm60, %v53, 0
    %64 = vmatpush.bf16.msra.mxu0 0
    %65 = vmatpush.bf16.msra.mxu0 0
    %66 = vmatpush.bf16.msra.mxu0 0
    %67 = vmatpush.bf16.msra.mxu0 0
    %68 = vmatpush.bf16.msra.mxu0 0
    %69 = vmatpush.bf16.msra.mxu0 0
    %70 = vmatpush.bf16.msra.mxu0 0
    %71 = vmatpush.bf16.msra.mxu0 %v58
    %72 = vmatmul.bf16.gmra.mxu0 %v62
    %v73 = vpop.f32.mrf.mxu0
    %v74 = vadd.f32 0.0, %v73
    %v75 = vpop.f32.mrf.mxu0
    %v76 = vadd.f32 0.0, %v75
    %77 = vdwg.mxu0
    %v78 = vld [vmem:[%s2] sm:$0x1]
    %v80 = vperm.slane %v78, 0
    %v82 = vrot.slane %v80, 1
    %v83 = vperm.slane %v80, 0
    %v84 = vperm.slane %v82, 0
    %v87 = vmul.f32 %v74, %v83
    %v88 = vmul.f32 %v76, %v84
    %vm89 = vcmask 261120
    %v90 = vsel %vm89, %v87, 0.0
    %91 = vadd.xlane.f32.xlu0 %v90
    %v92 = vpop.xlane.xlu0 %91
    %v93 = vsel %vm89, %v88, 0.0
    %94 = vadd.xlane.f32.xlu0 %v93
    %v95 = vpop.xlane.xlu0 %94
    %v98 = vlaneseq
    %v99 = vand.u32 %v98, 127
    %v100 = vperm.slane %v92, %v99
    %v101 = vperm.slane %v95, %v99
    %vm102 = vcmask 1041409
    %v103 = vsel %vm102, %v101, %v100
    %vm105 = vcmask 58368
    %v106 = vsel %vm105, %v103, -inf
    %107 = vmax.xlane.f32.xlu0 %v106
    %v108 = vpop.xlane.xlu0 %107
    %v110 = vperm.slane %v108, 0
    %v111 = vperm.slane %v108, 1
    %v114 = vsub.f32 %v92, %v110
    %v115 = vsub.f32 %v95, %v111
    %v116 = vmul.f32 %v114, 1.442695
    %v117 = vpow.pop %v116
    %v118 = vmul.f32 %v115, 1.442695
    %v119 = vpow.pop %v118
    %122 = vset.pattern.permute.xlu0 0
    %123 = vperm.xlu0 %122, %v117
    %v124 = vpop.permute.xlu0 %123
    %125 = vset.pattern.permute.xlu0 0
    %126 = vperm.xlu0 %125, %v119
    %v127 = vpop.permute.xlu0 %126
    %v128 = vperm.slane %v124, %v99
    %v129 = vperm.slane %v127, %v99
    %v130 = vsel %vm102, %v129, %v128
    %v132 = vsel %vm105, %v130, 0.0
    %133 = vadd.xlane.f32.xlu0 %v132
    %v134 = vpop.xlane.xlu0 %133
    %v135 = vrcp.pop %v134
    %v137 = vperm.slane %v135, 0
    %v138 = vperm.slane %v135, 1
    %v141 = vmul.f32 %v117, %v137
    %v142 = vmul.f32 %v119, %v138
    %144 = vset.pattern.permute.xlu0 0
    %145 = vperm.xlu0 %144, %v141
    %v146 = vpop.permute.xlu0 %145
    %149 = vset.pattern.permute.xlu0 0
    %150 = vperm.xlu0 %149, %v142
    %v151 = vpop.permute.xlu0 %150
    %v153 = vmul.f32 %v74, %v146
    %v154 = vmul.f32 %v76, %v151
    %vm155 = vcmask 523520
    %v156 = vsel %vm155, %v153, 0.0
    %v157 = vrot.slane %v156, 4
    %v158 = vadd.f32 %v156, %v157
    %v159 = vrot.slane %v158, 2
    %v160 = vadd.f32 %v158, %v159
    %v161 = vrot.slane %v160, 1
    %v162 = vadd.f32 %v160, %v161
    %v163 = vsel %vm155, %v154, 0.0
    %v164 = vrot.slane %v163, 4
    %v165 = vadd.f32 %v163, %v164
    %v166 = vrot.slane %v165, 2
    %v167 = vadd.f32 %v165, %v166
    %v168 = vrot.slane %v167, 1
    %v169 = vadd.f32 %v167, %v168
    %v172 = vsel %vm102, %v169, %v162
    %173 = vrot.lane.b32.xlu0 %v172, 96
    %v174 = vpop.permute.xlu0 %173
    %v176 = vadd.f32 %v80, %v174
    %v178 = vrot.slane %v176, 1
    %v179 = vperm.slane %v176, 0
    %v180 = vperm.slane %v178, 0
    %181 = vrot.lane.b32.xlu0 %v179, 32
    %v182 = vpop.permute.xlu0 %181
    %183 = vrot.lane.b32.xlu0 %v180, 32
    %v184 = vpop.permute.xlu0 %183
    %v187 = vmul.f32 %v74, %v182
    %v188 = vmul.f32 %v76, %v184
    %191 = vrot.lane.b32.xlu0 %v187, 96
    %v192 = vpop.permute.xlu0 %191
    %193 = vrot.lane.b32.xlu0 %v188, 96
    %v194 = vpop.permute.xlu0 %193
    %v197 = vsel %vm89, %v192, 0.0
    %198 = vadd.xlane.f32.xlu0 %v197
    %v199 = vpop.xlane.xlu0 %198
    %v200 = vsel %vm89, %v194, 0.0
    %201 = vadd.xlane.f32.xlu0 %v200
    %v202 = vpop.xlane.xlu0 %201
    %v205 = vperm.slane %v199, %v99
    %v206 = vperm.slane %v202, %v99
    %v207 = vsel %vm102, %v206, %v205
    %v209 = vsel %vm105, %v207, -inf
    %210 = vmax.xlane.f32.xlu0 %v209
    %v211 = vpop.xlane.xlu0 %210
    %v213 = vperm.slane %v211, 0
    %v214 = vperm.slane %v211, 1
    %v217 = vsub.f32 %v199, %v213
    %v218 = vsub.f32 %v202, %v214
    %v219 = vmul.f32 %v217, 1.442695
    %v220 = vpow.pop %v219
    %v221 = vmul.f32 %v218, 1.442695
    %v222 = vpow.pop %v221
    %225 = vset.pattern.permute.xlu0 0
    %226 = vperm.xlu0 %225, %v220
    %v227 = vpop.permute.xlu0 %226
    %228 = vset.pattern.permute.xlu0 0
    %229 = vperm.xlu0 %228, %v222
    %v230 = vpop.permute.xlu0 %229
    %v231 = vperm.slane %v227, %v99
    %v232 = vperm.slane %v230, %v99
    %v233 = vsel %vm102, %v232, %v231
    %v235 = vsel %vm105, %v233, 0.0
    %236 = vadd.xlane.f32.xlu0 %v235
    %v237 = vpop.xlane.xlu0 %236
    %v238 = vrcp.pop %v237
    %v240 = vperm.slane %v238, 0
    %v241 = vperm.slane %v238, 1
    %v244 = vmul.f32 %v220, %v240
    %v245 = vmul.f32 %v222, %v241
    %247 = vset.pattern.permute.xlu0 0
    %248 = vperm.xlu0 %247, %v244
    %v249 = vpop.permute.xlu0 %248
    %252 = vset.pattern.permute.xlu0 0
    %253 = vperm.xlu0 %252, %v245
    %v254 = vpop.permute.xlu0 %253
    %v256 = vmul.f32 %v74, %v249
    %v257 = vmul.f32 %v76, %v254
    %vm258 = vcmask 785920
    %v259 = vsel %vm258, %v256, 0.0
    %v260 = vrot.slane %v259, 4
    %v261 = vadd.f32 %v259, %v260
    %v262 = vrot.slane %v261, 2
    %v263 = vadd.f32 %v261, %v262
    %v264 = vrot.slane %v263, 1
    %v265 = vadd.f32 %v263, %v264
    %v266 = vsel %vm258, %v257, 0.0
    %v267 = vrot.slane %v266, 4
    %v268 = vadd.f32 %v266, %v267
    %v269 = vrot.slane %v268, 2
    %v270 = vadd.f32 %v268, %v269
    %v271 = vrot.slane %v270, 1
    %v272 = vadd.f32 %v270, %v271
    %v275 = vsel %vm102, %v272, %v265
    %276 = vrot.lane.b32.xlu0 %v275, 64
    %v277 = vpop.permute.xlu0 %276
    %v279 = vadd.f32 %v176, %v277
    %v280 = vpack.c.bf16 %v279, %v279
    %v281 = vld [vmem:[%s1] sm:$0x77]
    %v282 = vld [vmem:[%s4 + $0x80] sm:$0xf]
    %v283 = vld [vmem:[%s4 + $0x84] sm:$0xf]
    %v284 = vld [vmem:[%s4 + $0x88] sm:$0xf]
    %v285 = vld [vmem:[%s4 + $0x8c] sm:$0xf]
    %v286 = vld [vmem:[%s5] sm:$0x1]
    %v288 = vperm.slane %v286, 0
    %v294 = vunpack.c.l.b16 %v282
    %v295 = vunpack.c.l.b16 %v283
    %v296 = vunpack.c.l.b16 %v284
    %v297 = vunpack.c.l.b16 %v285
    %v298 = vpack.c.b16 %v295, %v294
    %v299 = vpack.c.b16 %v297, %v296
    %v303 = vsel %vm89, %v280, 0
    %305 = vmatpush.bf16.msra.mxu0 0
    %306 = vmatpush.bf16.msra.mxu0 0
    %307 = vmatpush.bf16.msra.mxu0 0
    %308 = vmatpush.bf16.msra.mxu0 0
    %309 = vmatpush.bf16.msra.mxu0 0
    %310 = vmatpush.bf16.msra.mxu0 0
    %311 = vmatpush.bf16.msra.mxu0 %v299
    %312 = vmatpush.bf16.msra.mxu0 %v298
    %313 = vmatmul.bf16.gmra.mxu0 %v303
    %v314 = vpop.f32.mrf.mxu0
    %v315 = vadd.f32 %v288, %v314
    %v316 = vpop.f32.mrf.mxu0
    %317 = vdwg.mxu0
    %v319 = vrot.slane %v315, 1
    %v320 = vperm.slane %v315, 0
    %v321 = vperm.slane %v319, 0
    %v322 = vrot.slane %v320, 1
    %v323 = vrot.slane %v320, 2
    %v324 = vrot.slane %v321, 1
    %v325 = vrot.slane %v321, 2
    %v326 = vld [vmem:[%s4] sm:$0xf]
    %v327 = vld [vmem:[%s4 + $0x4] sm:$0xf]
    %v328 = vld [vmem:[%s4 + $0x8] sm:$0xf]
    %v329 = vld [vmem:[%s4 + $0xc] sm:$0xf]
    %v330 = vld [vmem:[%s4 + $0x10] sm:$0xf]
    %v331 = vld [vmem:[%s4 + $0x14] sm:$0xf]
    %v332 = vld [vmem:[%s4 + $0x18] sm:$0xf]
    %v333 = vld [vmem:[%s4 + $0x1c] sm:$0xf]
    %v334 = vld [vmem:[%s4 + $0x20] sm:$0xf]
    %v335 = vld [vmem:[%s4 + $0x24] sm:$0xf]
    %v336 = vld [vmem:[%s4 + $0x28] sm:$0xf]
    %v337 = vld [vmem:[%s4 + $0x2c] sm:$0xf]
    %v338 = vld [vmem:[%s4 + $0x30] sm:$0xf]
    %v339 = vld [vmem:[%s4 + $0x34] sm:$0xf]
    %v340 = vld [vmem:[%s4 + $0x38] sm:$0xf]
    %v341 = vld [vmem:[%s4 + $0x3c] sm:$0xf]
    %v342 = vld [vmem:[%s4 + $0x40] sm:$0xf]
    %v343 = vld [vmem:[%s4 + $0x44] sm:$0xf]
    %v344 = vld [vmem:[%s4 + $0x48] sm:$0xf]
    %v345 = vld [vmem:[%s4 + $0x4c] sm:$0xf]
    %v346 = vld [vmem:[%s4 + $0x50] sm:$0xf]
    %v347 = vld [vmem:[%s4 + $0x54] sm:$0xf]
    %v348 = vld [vmem:[%s4 + $0x58] sm:$0xf]
    %v349 = vld [vmem:[%s4 + $0x5c] sm:$0xf]
    %v350 = vld [vmem:[%s4 + $0x60] sm:$0xf]
    %v351 = vld [vmem:[%s4 + $0x64] sm:$0xf]
    %v352 = vld [vmem:[%s4 + $0x68] sm:$0xf]
    %v353 = vld [vmem:[%s4 + $0x6c] sm:$0xf]
    %v354 = vld [vmem:[%s4 + $0x70] sm:$0xf]
    %v355 = vld [vmem:[%s4 + $0x74] sm:$0xf]
    %v356 = vld [vmem:[%s4 + $0x78] sm:$0xf]
    %v357 = vld [vmem:[%s4 + $0x7c] sm:$0xf]
    %v359 = vunpack.c.l.b16 %v281
    %v360 = vunpack.c.h.b16 %v281
    %v361 = vpack.c.b16 %v359, %v359
    %v362 = vpack.c.b16 %v360, %v360
    %v397 = vunpack.c.l.b16 %v326
    %v398 = vunpack.c.l.b16 %v327
    %v399 = vunpack.c.l.b16 %v328
    %v400 = vunpack.c.l.b16 %v329
    %v401 = vunpack.c.l.b16 %v330
    %v402 = vunpack.c.l.b16 %v331
    %v403 = vunpack.c.l.b16 %v332
    %v404 = vunpack.c.l.b16 %v333
    %v405 = vunpack.c.l.b16 %v334
    %v406 = vunpack.c.l.b16 %v335
    %v407 = vunpack.c.l.b16 %v336
    %v408 = vunpack.c.l.b16 %v337
    %v409 = vunpack.c.l.b16 %v338
    %v410 = vunpack.c.l.b16 %v339
    %v411 = vunpack.c.l.b16 %v340
    %v412 = vunpack.c.l.b16 %v341
    %v413 = vunpack.c.l.b16 %v342
    %v414 = vunpack.c.l.b16 %v343
    %v415 = vunpack.c.l.b16 %v344
    %v416 = vunpack.c.l.b16 %v345
    %v417 = vunpack.c.l.b16 %v346
    %v418 = vunpack.c.l.b16 %v347
    %v419 = vunpack.c.l.b16 %v348
    %v420 = vunpack.c.l.b16 %v349
    %v421 = vunpack.c.l.b16 %v350
    %v422 = vunpack.c.l.b16 %v351
    %v423 = vunpack.c.l.b16 %v352
    %v424 = vunpack.c.l.b16 %v353
    %v425 = vunpack.c.l.b16 %v354
    %v426 = vunpack.c.l.b16 %v355
    %v427 = vunpack.c.l.b16 %v356
    %v428 = vunpack.c.l.b16 %v357
    %v429 = vpack.c.b16 %v398, %v397
    %v430 = vpack.c.b16 %v400, %v399
    %v431 = vpack.c.b16 %v402, %v401
    %v432 = vpack.c.b16 %v404, %v403
    %v433 = vpack.c.b16 %v406, %v405
    %v434 = vpack.c.b16 %v408, %v407
    %v435 = vpack.c.b16 %v410, %v409
    %v436 = vpack.c.b16 %v412, %v411
    %v437 = vpack.c.b16 %v414, %v413
    %v438 = vpack.c.b16 %v416, %v415
    %v439 = vpack.c.b16 %v418, %v417
    %v440 = vpack.c.b16 %v420, %v419
    %v441 = vpack.c.b16 %v422, %v421
    %v442 = vpack.c.b16 %v424, %v423
    %v443 = vpack.c.b16 %v426, %v425
    %v444 = vpack.c.b16 %v428, %v427
    %461 = vst [vmem:[#allocation1] ss:$9 sm:$0xff] %v320
    %s462 = scalar_lea.vmem [#allocation1], 1
    %463 = vst [vmem:[%s462] ss:$9 sm:$0xff] %v322
    %s464 = scalar_lea.vmem [#allocation1], 2
    %465 = vst [vmem:[%s464] ss:$9 sm:$0xff] %v323
    %s466 = scalar_lea.vmem [#allocation1], 3
    %467 = vst [vmem:[%s466] ss:$9 sm:$0xff] %v321
    %s468 = scalar_lea.vmem [#allocation1], 4
    %469 = vst [vmem:[%s468] ss:$9 sm:$0xff] %v324
    %s470 = scalar_lea.vmem [#allocation1], 5
    %471 = vst [vmem:[%s470] ss:$9 sm:$0xff] %v325
    %v472 = vld [vmem:[#allocation1] sm:$0xff]
    %474 = vmatpush.bf16.msra.mxu0 %v436
    %475 = vmatpush.bf16.msra.mxu0 %v435
    %476 = vmatpush.bf16.msra.mxu0 %v434
    %477 = vmatpush.bf16.msra.mxu0 %v433
    %478 = vmatpush.bf16.msra.mxu0 %v432
    %479 = vmatpush.bf16.msra.mxu0 %v431
    %480 = vmatpush.bf16.msra.mxu0 %v430
    %481 = vmatpush.bf16.msra.mxu0 %v429
    %482 = vmatmul.bf16.gmra.mxu0 %v361
    %v483 = vpop.f32.mrf.mxu0
    %v484 = vadd.f32 %v472, %v483
    %v485 = vpop.f32.mrf.mxu0
    %486 = vdwg.mxu0
    %487 = vmatpush.bf16.msra.mxu0 %v444
    %488 = vmatpush.bf16.msra.mxu0 %v443
    %489 = vmatpush.bf16.msra.mxu0 %v442
    %490 = vmatpush.bf16.msra.mxu0 %v441
    %491 = vmatpush.bf16.msra.mxu0 %v440
    %492 = vmatpush.bf16.msra.mxu0 %v439
    %493 = vmatpush.bf16.msra.mxu0 %v438
    %494 = vmatpush.bf16.msra.mxu0 %v437
    %495 = vmatmul.bf16.gmra.mxu0 %v362
    %v496 = vpop.f32.mrf.mxu0
    %v497 = vadd.f32 %v484, %v496
    %v498 = vpop.f32.mrf.mxu0
    %499 = vdwg.mxu0
    %v500 = vmax.f32 %v497, 0.0
    %v501 = vpack.c.bf16 %v500, %v500
    %v502 = vld [vmem:[%s6] sm:$0xf]
    %v503 = vld [vmem:[%s6 + $0x4] sm:$0xf]
    %v504 = vld [vmem:[%s6 + $0x8] sm:$0xf]
    %v505 = vld [vmem:[%s6 + $0xc] sm:$0xf]
    %v506 = vld [vmem:[%s7] sm:$0x1]
    %v508 = vperm.slane %v506, 0
    %v514 = vunpack.c.l.b16 %v502
    %v515 = vunpack.c.l.b16 %v503
    %v516 = vunpack.c.l.b16 %v504
    %v517 = vunpack.c.l.b16 %v505
    %v518 = vpack.c.b16 %v515, %v514
    %v519 = vpack.c.b16 %v517, %v516
    %v523 = vsel %vm89, %v501, 0
    %525 = vmatpush.bf16.msra.mxu0 0
    %526 = vmatpush.bf16.msra.mxu0 0
    %527 = vmatpush.bf16.msra.mxu0 0
    %528 = vmatpush.bf16.msra.mxu0 0
    %529 = vmatpush.bf16.msra.mxu0 0
    %530 = vmatpush.bf16.msra.mxu0 0
    %531 = vmatpush.bf16.msra.mxu0 %v519
    %532 = vmatpush.bf16.msra.mxu0 %v518
    %533 = vmatmul.bf16.gmra.mxu0 %v523
    %v534 = vpop.f32.mrf.mxu0
    %v535 = vadd.f32 %v508, %v534
    %v536 = vpop.f32.mrf.mxu0
    %537 = vdwg.mxu0
    %v538 = vmax.f32 %v535, 0.0
    %v540 = vrot.slane %v538, 1
    %v541 = vrot.slane %v538, 2
    %v542 = vrot.slane %v538, 3
    %v543 = vrot.slane %v538, 4
    %v544 = vrot.slane %v538, 5
    %v550 = vld [vmem:[%s8 + $0x18] sm:$0xf]
    %v551 = vld [vmem:[%s8 + $0x1c] sm:$0xf]
    %v552 = vld [vmem:[%s8 + $0x20] sm:$0xf]
    %v553 = vld [vmem:[%s8 + $0x24] sm:$0xf]
    %v554 = vld [vmem:[%s9] sm:$0x1]
    %v556 = vperm.slane %v554, 0
    %v562 = vunpack.c.l.b16 %v550
    %v563 = vunpack.c.l.b16 %v551
    %v564 = vunpack.c.l.b16 %v552
    %v565 = vunpack.c.l.b16 %v553
    %v566 = vpack.c.b16 %v563, %v562
    %v567 = vpack.c.b16 %v565, %v564
    %570 = vmatpush.bf16.msra.mxu0 0
    %571 = vmatpush.bf16.msra.mxu0 0
    %572 = vmatpush.bf16.msra.mxu0 0
    %573 = vmatpush.bf16.msra.mxu0 0
    %574 = vmatpush.bf16.msra.mxu0 0
    %575 = vmatpush.bf16.msra.mxu0 0
    %576 = vmatpush.bf16.msra.mxu0 %v567
    %577 = vmatpush.bf16.msra.mxu0 %v566
    %578 = vmatmul.bf16.gmra.mxu0 %v303
    %v579 = vpop.f32.mrf.mxu0
    %v580 = vadd.f32 %v556, %v579
    %v581 = vpop.f32.mrf.mxu0
    %582 = vdwg.mxu0
    %v583 = vpack.c.bf16 %v538, %v538
    %v584 = vpack.c.bf16 %v542, %v542
    %v585 = vld [vmem:[%s8] sm:$0xf]
    %v586 = vld [vmem:[%s8 + $0x4] sm:$0xf]
    %v589 = vunpack.c.l.b16 %v583
    %v590 = vunpack.c.l.b16 %v584
    %v591 = vrot.slane %v590, 7
    %v592 = vsel %vm102, %v591, %v589
    %v593 = vpack.c.b16 %v592, %v592
    %v596 = vunpack.c.l.b16 %v585
    %v597 = vunpack.c.l.b16 %v586
    %v598 = vpack.c.b16 %v597, %v596
    %v601 = vsel %vm60, %v593, 0
    %603 = vmatpush.bf16.msra.mxu0 0
    %604 = vmatpush.bf16.msra.mxu0 0
    %605 = vmatpush.bf16.msra.mxu0 0
    %606 = vmatpush.bf16.msra.mxu0 0
    %607 = vmatpush.bf16.msra.mxu0 0
    %608 = vmatpush.bf16.msra.mxu0 0
    %609 = vmatpush.bf16.msra.mxu0 0
    %610 = vmatpush.bf16.msra.mxu0 %v598
    %611 = vmatmul.bf16.gmra.mxu0 %v601
    %v612 = vpop.f32.mrf.mxu0
    %v613 = vadd.f32 0.0, %v612
    %v614 = vpop.f32.mrf.mxu0
    %615 = vdwg.mxu0
    %v616 = vadd.f32 %v580, %v613
    %v617 = vpack.c.bf16 %v540, %v540
    %v618 = vpack.c.bf16 %v543, %v543
    %v619 = vld [vmem:[%s8 + $0x8] sm:$0xf]
    %v620 = vld [vmem:[%s8 + $0xc] sm:$0xf]
    %v623 = vunpack.c.l.b16 %v617
    %v624 = vunpack.c.l.b16 %v618
    %v625 = vrot.slane %v624, 7
    %v626 = vsel %vm102, %v625, %v623
    %v627 = vpack.c.b16 %v626, %v626
    %v630 = vunpack.c.l.b16 %v619
    %v631 = vunpack.c.l.b16 %v620
    %v632 = vpack.c.b16 %v631, %v630
    %v635 = vsel %vm60, %v627, 0
    %637 = vmatpush.bf16.msra.mxu0 0
    %638 = vmatpush.bf16.msra.mxu0 0
    %639 = vmatpush.bf16.msra.mxu0 0
    %640 = vmatpush.bf16.msra.mxu0 0
    %641 = vmatpush.bf16.msra.mxu0 0
    %642 = vmatpush.bf16.msra.mxu0 0
    %643 = vmatpush.bf16.msra.mxu0 0
    %644 = vmatpush.bf16.msra.mxu0 %v632
    %645 = vmatmul.bf16.gmra.mxu0 %v635
    %v646 = vpop.f32.mrf.mxu0
    %v647 = vadd.f32 0.0, %v646
    %v648 = vpop.f32.mrf.mxu0
    %649 = vdwg.mxu0
    %v650 = vadd.f32 %v616, %v647
    %v651 = vpack.c.bf16 %v541, %v541
    %v652 = vpack.c.bf16 %v544, %v544
    %v653 = vld [vmem:[%s8 + $0x10] sm:$0xf]
    %v654 = vld [vmem:[%s8 + $0x14] sm:$0xf]
    %v657 = vunpack.c.l.b16 %v651
    %v658 = vunpack.c.l.b16 %v652
    %v659 = vrot.slane %v658, 7
    %v660 = vsel %vm102, %v659, %v657
    %v661 = vpack.c.b16 %v660, %v660
    %v664 = vunpack.c.l.b16 %v653
    %v665 = vunpack.c.l.b16 %v654
    %v666 = vpack.c.b16 %v665, %v664
    %v669 = vsel %vm60, %v661, 0
    %671 = vmatpush.bf16.msra.mxu0 0
    %672 = vmatpush.bf16.msra.mxu0 0
    %673 = vmatpush.bf16.msra.mxu0 0
    %674 = vmatpush.bf16.msra.mxu0 0
    %675 = vmatpush.bf16.msra.mxu0 0
    %676 = vmatpush.bf16.msra.mxu0 0
    %677 = vmatpush.bf16.msra.mxu0 0
    %678 = vmatpush.bf16.msra.mxu0 %v666
    %679 = vmatmul.bf16.gmra.mxu0 %v669
    %v680 = vpop.f32.mrf.mxu0
    %v681 = vadd.f32 0.0, %v680
    %v682 = vpop.f32.mrf.mxu0
    %683 = vdwg.mxu0
    %v684 = vadd.f32 %v650, %v681
    %v685 = vmax.f32 %v684, 0.0
    %v686 = vpack.c.bf16 %v685, %v685
    %v687 = vld [vmem:[%s10] sm:$0xf]
    %v688 = vld [vmem:[%s11] sm:$0x1]
    %v690 = vperm.slane %v688, 0
    %vm692 = vcmask 64512
    %v694 = vsel %vm692, %v686, 0
    %vm696 = vcmask 1043456
    %v698 = vsel %vm696, %v687, 0
    %700 = vmatpush.bf16.msra.mxu0 0
    %701 = vmatpush.bf16.msra.mxu0 0
    %702 = vmatpush.bf16.msra.mxu0 0
    %703 = vmatpush.bf16.msra.mxu0 0
    %704 = vmatpush.bf16.msra.mxu0 0
    %705 = vmatpush.bf16.msra.mxu0 0
    %706 = vmatpush.bf16.msra.mxu0 0
    %707 = vmatpush.bf16.msra.mxu0 %v698
    %708 = vmatmul.bf16.gmra.mxu0 %v694
    %v709 = vpop.f32.mrf.mxu0
    %v710 = vadd.f32 %v690, %v709
    %v711 = vpop.f32.mrf.mxu0
    %712 = vdwg.mxu0
    %vm713 = vcmask 41984
    %714 = vst.msk [vmem:[#allocation2] sm:$0x3] %vm713, %v710
    %v715 = vsel %vm713, %v710, -inf
    %716 = vmax.xlane.f32.xlu0 %v715
    %v717 = vpop.xlane.xlu0 %716
    %vm718 = vcmp.eq.f32.partialorder %v710, %v717
    %v719 = vsel %vm718, %v99, 6
    %v720 = vsel %vm713, %v719, 2147483647
    %v721 = vand.u32 %v720, 65535
    %v722 = vshra.s32 %v720, 16
    %v723 = vcvt.s32.f32 %v721
    %v724 = vcvt.s32.f32 %v722
    %725 = vmin.xlane.f32.xlu0 %v724
    %v726 = vpop.xlane.xlu0 %725
    %vm727 = vcmp.eq.f32.partialorder %v724, %v726
    %v728 = vsel %vm727, %v723, inf
    %729 = vmin.xlane.f32.xlu0 %v728
    %v730 = vpop.xlane.xlu0 %729
    %v731 = vcvt.f32.s32 %v730
    %v732 = vcvt.f32.s32 %v726
    %v733 = vshll.u32 %v732, 16
    %v734 = vadd.s32 %v733, %v731
    %vm735 = vcmask 1024
    %736 = vst.msk [vmem:[%s13] sm:$0x3] %vm735, %v734
    // Predicated region
    $region50: #{tpu_custom_call.1} parent=1 // pred_check
      _
    $region51: #{tpu_custom_call.1} parent=1 // pred_check_branch
      %738 = sbr.rel (0) target = $region53
    $region52: #{tpu_custom_call.1} parent=1 // pred_region
      %740 = vsyncadd [#allocation3], 0
      %s742 = sshll.u32 [#allocation2], 4
      %s743 = int_to_ptr.vmem [resolvable:$true] %s742
      %s744 = sshll.u32 %s12, 4
      %s745 = int_to_ptr.hbm [resolvable:$true] %s744
      %747 = dma.vmem_to_hbm [thread:$0]  %s743, 32, %s745, [#allocation3]
    $region53: #{tpu_custom_call.1} parent=1 // pred_fallthru
      _
    // Predicated region
    $region54: #{tpu_custom_call.1} parent=1 // pred_check
      _
    $region55: #{tpu_custom_call.1} parent=1 // pred_check_branch
      %749 = sbr.rel (0) target = $region57
    $region56: #{tpu_custom_call.1} parent=1 // pred_region
      _
    $region57: #{tpu_custom_call.1} parent=1 // pred_fallthru
      _
    // Predicated region
    $region58: #{tpu_custom_call.1} parent=1 // pred_check
      _
    $region59: #{tpu_custom_call.1} parent=1 // pred_check_branch
      %751 = sbr.rel (0) target = $region61
    $region60: #{tpu_custom_call.1} parent=1 // pred_region
      %753 = dma.done [#allocation3], 32
    $region61: #{tpu_custom_call.1} parent=1 // pred_fallthru
      _
    // Predicated region
    $region62: #{tpu_custom_call.1} parent=1 // pred_check
      _
    $region63: #{tpu_custom_call.1} parent=1 // pred_check_branch
      %755 = sbr.rel (0) target = $region65
    $region64: #{tpu_custom_call.1} parent=1 // pred_region
      _
    $region65: #{tpu_custom_call.1} parent=1 // pred_fallthru
      _
    %756 = vsyncpa [#allocation3], 1

</llo_original>
